<compile_context>
chip_gen: v7x
topology: tpu7x:2x2x1
jax: 0.10.0
libtpu: 0.0.40
codegen_flags: <defaults>
</compile_context>

<pallas_src>
import functools

import jax
import jax.numpy as jnp
from jax import lax
from jax.experimental import pallas as pl
from jax.experimental.pallas import tpu as pltpu


# ---------------------------------------------------------------------------
# Pallas kernels
# ---------------------------------------------------------------------------

def _conv_row_gemm_kernel(x_ref, w_ref, b_ref, o_ref, p_ref, *, kh, kw, relu):
    """Fused VALID stride-1 conv for one image.

    Layouts (per grid step / batch element):
      x_ref: (H, C, W)               input feature map (bf16/f32), fully in VMEM
      w_ref: (OC, kh*kw*C)           flattened weights, K-index = (i*kw + j)*C + c
      b_ref: (OC, 1)                 float32 bias
      o_ref: (OH, OC, OW)            output feature map
      p_ref: (kh*kw*C, OW)           VMEM scratch holding the per-row patch matrix
    """
    C = x_ref.shape[1]
    OH, OC, OW = o_ref.shape
    wmat = w_ref[...]                      # loaded once per grid step
    bias = b_ref[...]

    def row_body(r, carry):
        # Build P[(i*kw + j)*C + c, ow] = x[r + i, c, ow + j]  (in-VMEM im2col).
        for i in range(kh):
            xrow = x_ref[r + i]            # (C, W): dynamic index on leading axis
            for j in range(kw):
                p_ref[(i * kw + j) * C:(i * kw + j + 1) * C, :] = xrow[:, j:j + OW]
        acc = jnp.dot(wmat, p_ref[...], preferred_element_type=jnp.float32)  # (OC, OW)
        y = acc + bias
        if relu:
            y = jnp.maximum(y, 0.0)
        o_ref[r] = y.astype(o_ref.dtype)
        return carry

    lax.fori_loop(0, OH, row_body, 0)


def _mlp_head_kernel(x_ref, w1_ref, b1_ref, w2_ref, b2_ref, w3_ref, b3_ref, o_ref):
    """Whole classifier head in one single-step kernel (everything fits VMEM)."""
    h = jnp.dot(x_ref[...], w1_ref[...], preferred_element_type=jnp.float32)
    h = jnp.tanh(h + b1_ref[...])
    # TODO(synk): Dropout(0.5) is identity in eval mode.
    h = jnp.dot(h.astype(w2_ref.dtype), w2_ref[...], preferred_element_type=jnp.float32)
    h = jnp.tanh(h + b2_ref[...])
    # TODO(synk): Dropout(0.5) is identity in eval mode.
    h = jnp.dot(h.astype(w3_ref.dtype), w3_ref[...], preferred_element_type=jnp.float32)
    o_ref[...] = (h + b3_ref[...]).astype(o_ref.dtype)


# ---------------------------------------------------------------------------
# pallas_call wrappers
# ---------------------------------------------------------------------------

def conv_pallas(x, wmat, bias, kh, kw, relu=True):
    """x: (N, H, C, W); wmat: (OC, kh*kw*C); bias: (OC, 1) f32 -> (N, OH, OC, OW)."""
    N, H, C, W = x.shape
    OC, K = wmat.shape
    assert K == kh * kw * C
    OH, OW = H - kh + 1, W - kw + 1
    kern = functools.partial(_conv_row_gemm_kernel, kh=kh, kw=kw, relu=relu)
    return pl.pallas_call(
        kern,
        out_shape=jax.ShapeDtypeStruct((N, OH, OC, OW), x.dtype),
        grid=(N,),
        in_specs=[
            pl.BlockSpec((None, H, C, W), lambda n: (n, 0, 0, 0)),
            pl.BlockSpec((OC, K), lambda n: (0, 0)),      # constant -> DMA'd once
            pl.BlockSpec((OC, 1), lambda n: (0, 0)),      # constant -> DMA'd once
        ],
        out_specs=pl.BlockSpec((None, OH, OC, OW), lambda n: (n, 0, 0, 0)),
        scratch_shapes=[pltpu.VMEM((K, OW), x.dtype)],
        compiler_params=pltpu.CompilerParams(dimension_semantics=("parallel",)),
    )(x, wmat, bias)


def mlp_head_pallas(x, w1, b1, w2, b2, w3, b3):
    """Single-step GEMM kernel for the 3 Linear layers (+ Tanh) of the head."""
    args = (x, w1, b1, w2, b2, w3, b3)
    in_specs = [pl.BlockSpec(a.shape, lambda i: (0, 0)) for a in args]
    M, N_out = x.shape[0], w3.shape[1]
    return pl.pallas_call(
        _mlp_head_kernel,
        out_shape=jax.ShapeDtypeStruct((M, N_out), jnp.float32),
        grid=(1,),
        in_specs=in_specs,
        out_specs=pl.BlockSpec((M, N_out), lambda i: (0, 0)),
    )(*args)


# ---------------------------------------------------------------------------
# Plain-JAX glue: layout helpers, BN folding, stride-2 -> space-to-depth
# ---------------------------------------------------------------------------

def space_to_depth(x):
    """(N, H, C, W) -> (N, ceil(H/2), 4C, ceil(W/2)); pads H/W to even with zeros.

    Channel ordering: c2 = (dy*2 + dx)*C + c  <->  x[n, 2p+dy, c, 2q+dx]."""
    N, H, C, W = x.shape
    He, We = -(-H // 2) * 2, -(-W // 2) * 2
    x = jnp.pad(x, ((0, 0), (0, He - H), (0, 0), (0, We - W)))
    x = x.reshape(N, He // 2, 2, C, We // 2, 2)        # (n, p, dy, c, q, dx)
    x = x.transpose(0, 1, 2, 5, 3, 4)                  # (n, p, dy, dx, c, q)
    return x.reshape(N, He // 2, 4 * C, We // 2)


def flatten_conv_weight(w_oihw, stride):
    """OIHW weight -> (wmat (OC, kh'*kw'*C'), kh', kw') matching the kernel's patch
    ordering.  stride==2 weights are space-to-depth rearranged to a 2x2 kernel."""
    OC, C, KH, KW = w_oihw.shape
    if stride == 2:
        kh2, kw2 = -(-KH // 2), -(-KW // 2)
        wz = jnp.pad(w_oihw, ((0, 0), (0, 0), (0, 2 * kh2 - KH), (0, 2 * kw2 - KW)))
        wz = wz.reshape(OC, C, kh2, 2, kw2, 2)          # (oc, c, a, dy, b, dx)
        wz = wz.transpose(0, 3, 5, 1, 2, 4)             # (oc, dy, dx, c, a, b)
        w_oihw = wz.reshape(OC, 4 * C, kh2, kw2)
        C, KH, KW = 4 * C, kh2, kw2
    wmat = w_oihw.transpose(0, 2, 3, 1).reshape(OC, KH * KW * C)
    return wmat, KH, KW


def fold_bn_into_conv(w_oihw, b, gamma, beta, mean, var, eps=1e-5):
    """Fold eval-mode BatchNorm (applied to the conv INPUT) into the conv weight/bias."""
    scale = gamma / jnp.sqrt(var + eps)
    shift = beta - mean * scale
    w_f = w_oihw * scale[None, :, None, None]
    b_f = b + jnp.einsum("oikl,i->o", w_oihw, shift)
    return w_f, b_f


def conv_layer(x, w_oihw, b, stride, relu=True, dtype=jnp.bfloat16):
    """PyTorch-style Conv2d (VALID) + optional ReLU. x is (N, H, C, W)."""
    N, H, C, W = x.shape
    KH, KW = w_oihw.shape[2], w_oihw.shape[3]
    oh = (H - KH) // stride + 1
    ow = (W - KW) // stride + 1
    if stride == 2:
        x = space_to_depth(x)
    elif stride != 1:
        raise NotImplementedError("only stride 1 and 2 are used by SLClassifier")
    wmat, kh, kw = flatten_conv_weight(w_oihw, stride)
    y = conv_pallas(x.astype(dtype), wmat.astype(dtype),
                    b.reshape(-1, 1).astype(jnp.float32), kh, kw, relu=relu)
    # For odd sizes the space-to-depth path may compute extra (junk) rows/cols on
    # the right/bottom; slice to the exact PyTorch output size (no-op if equal).
    return y[:, :oh, :, :ow]


# ---------------------------------------------------------------------------
# Parameters (deterministic, synthetic)
# ---------------------------------------------------------------------------

# (in_ch, out_ch, kernel, stride) for the 8 Conv2d layers.
_CONV_SPECS = [(3, 32, 3, 1), (32, 32, 3, 1), (32, 64, 4, 2), (64, 64, 4, 1),
               (64, 64, 4, 2), (64, 64, 4, 1), (64, 32, 3, 2), (32, 16, 4, 1)]
_BN_CHANNELS = [3, 32, 64, 64]
_FC_SPECS = [(5184, 256), (256, 128), (128, 29)]
# conv index -> index of the BatchNorm applied to that conv's input (to fold).
_BN_BEFORE = {0: 0, 2: 1, 4: 2, 6: 3}


def init_params(key):
    params = {"conv": [], "bn": [], "fc": []}
    for (ic, oc, k, _s) in _CONV_SPECS:
        key, k_w, k_b = jax.random.split(key, 3)
        fan_in = ic * k * k
        w = jax.random.normal(k_w, (oc, ic, k, k), jnp.float32) / jnp.sqrt(fan_in)
        b = 0.01 * jax.random.normal(k_b, (oc,), jnp.float32)
        params["conv"].append((w, b))
    for c in _BN_CHANNELS:
        key, k1, k2, k3, k4 = jax.random.split(key, 5)
        gamma = 1.0 + 0.1 * jax.random.normal(k1, (c,), jnp.float32)
        beta = 0.1 * jax.random.normal(k2, (c,), jnp.float32)
        rmean = 0.1 * jax.random.normal(k3, (c,), jnp.float32)
        rvar = 0.5 + jnp.abs(jax.random.normal(k4, (c,), jnp.float32)) * 0.5
        params["bn"].append((gamma, beta, rmean, rvar))
    for (fi, fo) in _FC_SPECS:
        key, k_w, k_b = jax.random.split(key, 3)
        # Stored pre-transposed as (in, out) so the forward never transposes a
        # large weight matrix (PyTorch stores (out, in)).
        w = jax.random.normal(k_w, (fi, fo), jnp.float32) / jnp.sqrt(fi)
        b = 0.01 * jax.random.normal(k_b, (fo,), jnp.float32)
        params["fc"].append((w, b))
    return params


# ---------------------------------------------------------------------------
# Forward pass (mirrors SLClassifier.forward, eval mode)
# ---------------------------------------------------------------------------

def sl_classifier_forward(params, x_nchw, dtype=jnp.bfloat16):
    # NCHW -> (N, H, C, W): lane axis is W -> lane-dense activations everywhere.
    x = jnp.transpose(x_nchw, (0, 2, 1, 3)).astype(dtype)

    for idx, (_ic, _oc, _k, s) in enumerate(_CONV_SPECS):
        w, b = params["conv"][idx]
        if idx in _BN_BEFORE:  # fold the eval-mode BN on this conv's input
            w, b = fold_bn_into_conv(w, b, *params["bn"][_BN_BEFORE[idx]])
        x = conv_layer(x, w, b, s, relu=True, dtype=dtype)

    # Flatten(start_dim=1) in PyTorch NCHW order: (N, H, C, W) -> (N, C, H, W).
    n = x.shape[0]
    x = jnp.transpose(x, (0, 2, 1, 3)).reshape(n, -1)          # (N, 5184)

    (w1, b1), (w2, b2), (w3, b3) = params["fc"]                # (in, out) weights
    return mlp_head_pallas(
        x.astype(dtype),
        w1.astype(dtype), b1.reshape(1, -1).astype(jnp.float32),
        w2.astype(dtype), b2.reshape(1, -1).astype(jnp.float32),
        w3.astype(dtype), b3.reshape(1, -1).astype(jnp.float32),
    )


# ---------------------------------------------------------------------------
# Tiny f32 self-check of the fused conv kernel against lax.conv
# ---------------------------------------------------------------------------

def _self_check_conv():
    base = jax.random.PRNGKey(42)
    cases = [(5, 7, 3, 1, 12, 15),   # stride 1
             (5, 6, 4, 2, 13, 16),   # stride 2, odd H (exercises output re-slice)
             (4, 6, 3, 2, 11, 11)]   # stride 2, k=3 (zero-padded s2d weights)
    for idx, (C, OC, k, s, H, W) in enumerate(cases):
        kx, k_w, k_b = jax.random.split(jax.random.fold_in(base, idx), 3)
        x = jax.random.normal(kx, (2, C, H, W), jnp.float32)
        w = jax.random.normal(k_w, (OC, C, k, k), jnp.float32)
        b = jax.random.normal(k_b, (OC,), jnp.float32)
        ref = lax.conv_general_dilated(
            x, w, (s, s), "VALID", dimension_numbers=("NCHW", "OIHW", "NCHW"))
        ref = ref + b[None, :, None, None]
        got = conv_layer(jnp.transpose(x, (0, 2, 1, 3)), w, b, s,
                         relu=False, dtype=jnp.float32)
        got = jnp.transpose(got, (0, 2, 1, 3))
        assert got.shape == ref.shape, (got.shape, ref.shape)
        err = float(jnp.max(jnp.abs(got - ref)))
        scale = float(jnp.max(jnp.abs(ref)))
        assert err <= 0.05 * scale + 0.05, (idx, err, scale)


# ---------------------------------------------------------------------------
# Main
# ---------------------------------------------------------------------------

if __name__ == "__main__":
    _self_check_conv()

    key = jax.random.PRNGKey(0)
    k_in, k_p = jax.random.split(key)

    # 200x200 input is the spatial size implied by Linear(5184, .) = 16 * 18 * 18.
    x = jax.random.normal(k_in, (2, 3, 200, 200), jnp.float32)   # NCHW, like PyTorch
    params = init_params(k_p)

    fwd = jax.jit(sl_classifier_forward)
    out = jax.block_until_ready(fwd(params, x))

    assert out.shape == (2, 29), out.shape
    assert bool(jnp.all(jnp.isfinite(out)))
    print("KERNEL_OK")
</pallas_src>

<mosaic_0001>
module attributes {stable_mosaic.version = 11 : i64} {
  func.func @_conv_row_gemm_kernel(%arg0: i32, %arg1: memref<1x12x5x15xf32, #tpu.memory_space<vmem>>, %arg2: memref<7x45xf32, #tpu.memory_space<vmem>>, %arg3: memref<7x1xf32, #tpu.memory_space<vmem>>, %arg4: memref<1x10x7x13xf32, #tpu.memory_space<vmem>>, %arg5: memref<45x13xf32, #tpu.memory_space<vmem>>) attributes {dimension_semantics = [#tpu.dimension_semantics<parallel>], iteration_bounds = array<i64: 2>, scalar_prefetch = 0 : i64, scratch_operands = 1 : i64, tpu.core_type = #tpu.core_type<tc>, window_params = [{transform_indices = @transform_0, window_bounds = array<i64: 1, 12, 5, 15>}, {pipeline_mode = #tpu.pipeline_mode<synchronous>, transform_indices = @transform_1, window_bounds = array<i64: 7, 45>}, {pipeline_mode = #tpu.pipeline_mode<synchronous>, transform_indices = @transform_2, window_bounds = array<i64: 7, 1>}, {transform_indices = @transform_3, window_bounds = array<i64: 1, 10, 7, 13>}]} {
    %c0 = arith.constant 0 : index
    %c0_0 = arith.constant 0 : index
    %0 = vector.load %arg2[%c0, %c0_0] : memref<7x45xf32, #tpu.memory_space<vmem>>, vector<7x45xf32>
    %c0_1 = arith.constant 0 : index
    %c0_2 = arith.constant 0 : index
    %1 = vector.load %arg3[%c0_1, %c0_2] : memref<7x1xf32, #tpu.memory_space<vmem>>, vector<7x1xf32>
    %c0_i32 = arith.constant 0 : i32
    %c10_i32 = arith.constant 10 : i32
    %2 = arith.addi %c0_i32, %c10_i32 : i32
    %c1_i32 = arith.constant 1 : i32
    scf.for %arg6 = %c0_i32 to %2 step %c1_i32  : i32 {
      %c0_i32_4 = arith.constant 0 : i32
      %3 = arith.addi %arg6, %c0_i32_4 : i32
      %c0_5 = arith.constant 0 : index
      %4 = arith.index_cast %3 : i32 to index
      %c0_6 = arith.constant 0 : index
      %c0_7 = arith.constant 0 : index
      %5 = vector.load %arg1[%c0_5, %4, %c0_6, %c0_7] : memref<1x12x5x15xf32, #tpu.memory_space<vmem>>, vector<1x1x5x15xf32>
      %6 = vector.shape_cast %5 : vector<1x1x5x15xf32> to vector<5x15xf32>
      %7 = vector.extract_strided_slice %6 {offsets = [0, 0], sizes = [5, 13], strides = [1, 1]} : vector<5x15xf32> to vector<5x13xf32>
      %c0_8 = arith.constant 0 : index
      %c0_9 = arith.constant 0 : index
      %8 = vector.load %arg5[%c0_8, %c0_9] : memref<45x13xf32, #tpu.memory_space<vmem>>, vector<5x13xf32>
      tpu.vector_store %arg5[%c0_8, %c0_9], %7 {strides = array<i32>} : memref<45x13xf32, #tpu.memory_space<vmem>>, vector<5x13xf32>,
      %9 = vector.extract_strided_slice %6 {offsets = [0, 1], sizes = [5, 13], strides = [1, 1]} : vector<5x15xf32> to vector<5x13xf32>
      %c5 = arith.constant 5 : index
      %c0_10 = arith.constant 0 : index
      %10 = vector.load %arg5[%c5, %c0_10] : memref<45x13xf32, #tpu.memory_space<vmem>>, vector<5x13xf32>
      tpu.vector_store %arg5[%c5, %c0_10], %9 {strides = array<i32>} : memref<45x13xf32, #tpu.memory_space<vmem>>, vector<5x13xf32>,
      %11 = vector.extract_strided_slice %6 {offsets = [0, 2], sizes = [5, 13], strides = [1, 1]} : vector<5x15xf32> to vector<5x13xf32>
      %c10 = arith.constant 10 : index
      %c0_11 = arith.constant 0 : index
      %12 = vector.load %arg5[%c10, %c0_11] : memref<45x13xf32, #tpu.memory_space<vmem>>, vector<5x13xf32>
      tpu.vector_store %arg5[%c10, %c0_11], %11 {strides = array<i32>} : memref<45x13xf32, #tpu.memory_space<vmem>>, vector<5x13xf32>,
      %c1_i32_12 = arith.constant 1 : i32
      %13 = arith.addi %arg6, %c1_i32_12 : i32
      %c0_13 = arith.constant 0 : index
      %14 = arith.index_cast %13 : i32 to index
      %c0_14 = arith.constant 0 : index
      %c0_15 = arith.constant 0 : index
      %15 = vector.load %arg1[%c0_13, %14, %c0_14, %c0_15] : memref<1x12x5x15xf32, #tpu.memory_space<vmem>>, vector<1x1x5x15xf32>
      %16 = vector.shape_cast %15 : vector<1x1x5x15xf32> to vector<5x15xf32>
      %17 = vector.extract_strided_slice %16 {offsets = [0, 0], sizes = [5, 13], strides = [1, 1]} : vector<5x15xf32> to vector<5x13xf32>
      %c15 = arith.constant 15 : index
      %c0_16 = arith.constant 0 : index
      %18 = vector.load %arg5[%c15, %c0_16] : memref<45x13xf32, #tpu.memory_space<vmem>>, vector<5x13xf32>
      tpu.vector_store %arg5[%c15, %c0_16], %17 {strides = array<i32>} : memref<45x13xf32, #tpu.memory_space<vmem>>, vector<5x13xf32>,
      %19 = vector.extract_strided_slice %16 {offsets = [0, 1], sizes = [5, 13], strides = [1, 1]} : vector<5x15xf32> to vector<5x13xf32>
      %c20 = arith.constant 20 : index
      %c0_17 = arith.constant 0 : index
      %20 = vector.load %arg5[%c20, %c0_17] : memref<45x13xf32, #tpu.memory_space<vmem>>, vector<5x13xf32>
      tpu.vector_store %arg5[%c20, %c0_17], %19 {strides = array<i32>} : memref<45x13xf32, #tpu.memory_space<vmem>>, vector<5x13xf32>,
      %21 = vector.extract_strided_slice %16 {offsets = [0, 2], sizes = [5, 13], strides = [1, 1]} : vector<5x15xf32> to vector<5x13xf32>
      %c25 = arith.constant 25 : index
      %c0_18 = arith.constant 0 : index
      %22 = vector.load %arg5[%c25, %c0_18] : memref<45x13xf32, #tpu.memory_space<vmem>>, vector<5x13xf32>
      tpu.vector_store %arg5[%c25, %c0_18], %21 {strides = array<i32>} : memref<45x13xf32, #tpu.memory_space<vmem>>, vector<5x13xf32>,
      %c2_i32 = arith.constant 2 : i32
      %23 = arith.addi %arg6, %c2_i32 : i32
      %c0_19 = arith.constant 0 : index
      %24 = arith.index_cast %23 : i32 to index
      %c0_20 = arith.constant 0 : index
      %c0_21 = arith.constant 0 : index
      %25 = vector.load %arg1[%c0_19, %24, %c0_20, %c0_21] : memref<1x12x5x15xf32, #tpu.memory_space<vmem>>, vector<1x1x5x15xf32>
      %26 = vector.shape_cast %25 : vector<1x1x5x15xf32> to vector<5x15xf32>
      %27 = vector.extract_strided_slice %26 {offsets = [0, 0], sizes = [5, 13], strides = [1, 1]} : vector<5x15xf32> to vector<5x13xf32>
      %c30 = arith.constant 30 : index
      %c0_22 = arith.constant 0 : index
      %28 = vector.load %arg5[%c30, %c0_22] : memref<45x13xf32, #tpu.memory_space<vmem>>, vector<5x13xf32>
      tpu.vector_store %arg5[%c30, %c0_22], %27 {strides = array<i32>} : memref<45x13xf32, #tpu.memory_space<vmem>>, vector<5x13xf32>,
      %29 = vector.extract_strided_slice %26 {offsets = [0, 1], sizes = [5, 13], strides = [1, 1]} : vector<5x15xf32> to vector<5x13xf32>
      %c35 = arith.constant 35 : index
      %c0_23 = arith.constant 0 : index
      %30 = vector.load %arg5[%c35, %c0_23] : memref<45x13xf32, #tpu.memory_space<vmem>>, vector<5x13xf32>
      tpu.vector_store %arg5[%c35, %c0_23], %29 {strides = array<i32>} : memref<45x13xf32, #tpu.memory_space<vmem>>, vector<5x13xf32>,
      %31 = vector.extract_strided_slice %26 {offsets = [0, 2], sizes = [5, 13], strides = [1, 1]} : vector<5x15xf32> to vector<5x13xf32>
      %c40 = arith.constant 40 : index
      %c0_24 = arith.constant 0 : index
      %32 = vector.load %arg5[%c40, %c0_24] : memref<45x13xf32, #tpu.memory_space<vmem>>, vector<5x13xf32>
      tpu.vector_store %arg5[%c40, %c0_24], %31 {strides = array<i32>} : memref<45x13xf32, #tpu.memory_space<vmem>>, vector<5x13xf32>,
      %c0_25 = arith.constant 0 : index
      %c0_26 = arith.constant 0 : index
      %33 = vector.load %arg5[%c0_25, %c0_26] : memref<45x13xf32, #tpu.memory_space<vmem>>, vector<45x13xf32>
      %cst = arith.constant dense<0.000000e+00> : vector<7x13xf32>
      %34 = tpu.matmul %0, %33, %cst {dimension_numbers = #tpu.dot_dimension_numbers<[1], [0], [0], [1], [0, 0, 1, 1], [], []>} : vector<7x45xf32>, vector<45x13xf32>, vector<7x13xf32> -> vector<7x13xf32>
      %35 = vector.broadcast %1 : vector<7x1xf32> to vector<7x13xf32>
      %36 = arith.addf %34, %35 : vector<7x13xf32>
      %c0_27 = arith.constant 0 : index
      %37 = arith.index_cast %arg6 : i32 to index
      %c0_28 = arith.constant 0 : index
      %c0_29 = arith.constant 0 : index
      %38 = vector.load %arg4[%c0_27, %37, %c0_28, %c0_29] : memref<1x10x7x13xf32, #tpu.memory_space<vmem>>, vector<1x1x7x13xf32>
      %39 = vector.shape_cast %38 : vector<1x1x7x13xf32> to vector<7x13xf32>
      %40 = vector.shape_cast %36 : vector<7x13xf32> to vector<1x1x7x13xf32>
      tpu.vector_store %arg4[%c0_27, %37, %c0_28, %c0_29], %40 {strides = array<i32>} : memref<1x10x7x13xf32, #tpu.memory_space<vmem>>, vector<1x1x7x13xf32>,
    }
    %c10_i32_3 = arith.constant 10 : i32
    return
  }
  func.func @transform_0(%arg0: i32) -> (i32, i32, i32, i32) {
    %c0_i32 = arith.constant 0 : i32
    %c0_i32_0 = arith.constant 0 : i32
    %c0_i32_1 = arith.constant 0 : i32
    %c0_i32_2 = arith.constant 0 : i32
    return %arg0, %c0_i32, %c0_i32_0, %c0_i32_1 : i32, i32, i32, i32
  }
  func.func @transform_1(%arg0: i32) -> (i32, i32) {
    %c0_i32 = arith.constant 0 : i32
    %c0_i32_0 = arith.constant 0 : i32
    %c0_i32_1 = arith.constant 0 : i32
    return %c0_i32, %c0_i32_0 : i32, i32
  }
  func.func @transform_2(%arg0: i32) -> (i32, i32) {
    %c0_i32 = arith.constant 0 : i32
    %c0_i32_0 = arith.constant 0 : i32
    %c0_i32_1 = arith.constant 0 : i32
    return %c0_i32, %c0_i32_0 : i32, i32
  }
  func.func @transform_3(%arg0: i32) -> (i32, i32, i32, i32) {
    %c0_i32 = arith.constant 0 : i32
    %c0_i32_0 = arith.constant 0 : i32
    %c0_i32_1 = arith.constant 0 : i32
    %c0_i32_2 = arith.constant 0 : i32
    return %arg0, %c0_i32, %c0_i32_0, %c0_i32_1 : i32, i32, i32, i32
  }
}

</mosaic_0001>

<llo_original>
// kernel: tpu_custom_call.1
$region0: #{tpu_custom_call.1}
  #allocation0 [shape = 'u32[]', space=smem, size = 0x4, offset = 0x4, fixed_abs, tag = 'smem constant byte address 0x4 - core index']
  #allocation1 [shape = 'u32[144,128]{1,0:T(1,128)}', space=vmem, size = 0x12000, scoped, tag = 'internal scratch']
  #allocation2 [shape = 'f32[45,13]{1,0:T(8,128)}', space=vmem, size = 0x6000, scoped, tag = 'scratch operand']
  %s0 = inlined_call_operand.vmem [shape: f32[2,12,5,15], index: 0, kind: input, shape index: {}]
  %s1 = inlined_call_operand.vmem [shape: f32[7,45], index: 1, kind: input, shape index: {}]
  %s2 = inlined_call_operand.vmem [shape: f32[7,1], index: 2, kind: input, shape index: {}]
  %s3 = inlined_call_operand.vmem [shape: f32[2,10,7,13], index: 3, kind: output, shape index: {}]
  %s4 = sld [smem:[#allocation0]]
  $region52: #{tpu_custom_call.1} parent=0
    _
  %s6 = ssub.s32 1, %s4
  %s7 = scalar_select 0, %s6, %s4
  loop: start=0, step=1, limit=4
  $region2: #{tpu_custom_call.1} parent=0 // loop_pre_header
    _
  $region3: #{tpu_custom_call.1} parent=0 // loop_header
    %s9 = sphi 0, %s13
    %p10 = scmp.ge.s32.totalorder %s9, 4
    %s19 = sphi 0, %s21
    %s22 = sphi 0, %s19
    %s23 = sphi 0, %s22
    %s39 = sphi 0, %s23
    %s43 = sphi 0, %s43
    %s45 = sphi 0, %s43
    %s46 = sphi 0, %s45
    %s60 = sphi 0, %s46
    %s64 = sphi 0, %s64
    %s66 = sphi 0, %s64
    %s67 = sphi 0, %s66
    %s81 = sphi 0, %s67
    %s87 = sphi 0, %s89
    %s90 = sphi 0, %s87
    %s91 = sphi 0, %s90
    %s107 = sphi 0, %s91
  $region4: #{tpu_custom_call.1} parent=0 // loop_header_branch
    %12 = sbr.rel (%p10) target = $region8
  $region5: #{tpu_custom_call.1} parent=0 // loop_body
    %s14 = ssub.s32 %s9, 1
    %s15 = ssub.s32 %s9, 2
    %s16 = sadd.s32 %s9, 1
    %s17 = ssub.s32 %s9, %s16
    %p18 = scmp.eq.s32.totalorder %s17, 0
    %s20 = sadd.s32 %s19, 1
    %s21 = scalar_select %p18, %s19, %s20
    %p24 = pneg %p18
    %p25 = scmp.eq.s32.totalorder %s9, 1
    %p26 = por %p24, %p25
    %p27 = scmp.ne.s32.totalorder %s19, %s22
    %p28 = scmp.eq.s32.totalorder %s9, 0
    %p29 = por %p27, %p28
    %p30 = scmp.ne.s32.totalorder %s19, %s22
    %p31 = scmp.eq.s32.totalorder %s14, 1
    %p32 = por %p30, %p31
    %p33 = scmp.ne.s32.totalorder %s22, %s23
    %p34 = scmp.eq.s32.totalorder %s14, 0
    %p35 = por %p33, %p34
    %p36 = scmp.ne.s32.totalorder %s22, %s23
    %p37 = scmp.eq.s32.totalorder %s15, 1
    %p38 = por %p36, %p37
    %p40 = scmp.ne.s32.totalorder %s23, %s39
    %p41 = scmp.eq.s32.totalorder %s15, 0
    %p42 = por %p40, %p41
    %s44 = sadd.s32 %s43, 1
    %p47 = scmp.eq.s32.totalorder %s9, 1
    %p48 = scmp.ne.s32.totalorder %s43, %s45
    %p49 = scmp.eq.s32.totalorder %s9, 0
    %p50 = por %p48, %p49
    %p51 = scmp.ne.s32.totalorder %s43, %s45
    %p52 = scmp.eq.s32.totalorder %s14, 1
    %p53 = por %p51, %p52
    %p54 = scmp.ne.s32.totalorder %s45, %s46
    %p55 = scmp.eq.s32.totalorder %s14, 0
    %p56 = por %p54, %p55
    %p57 = scmp.ne.s32.totalorder %s45, %s46
    %p58 = scmp.eq.s32.totalorder %s15, 1
    %p59 = por %p57, %p58
    %p61 = scmp.ne.s32.totalorder %s46, %s60
    %p62 = scmp.eq.s32.totalorder %s15, 0
    %p63 = por %p61, %p62
    %s65 = sadd.s32 %s64, 1
    %p68 = scmp.eq.s32.totalorder %s9, 1
    %p69 = scmp.ne.s32.totalorder %s64, %s66
    %p70 = scmp.eq.s32.totalorder %s9, 0
    %p71 = por %p69, %p70
    %p72 = scmp.ne.s32.totalorder %s64, %s66
    %p73 = scmp.eq.s32.totalorder %s14, 1
    %p74 = por %p72, %p73
    %p75 = scmp.ne.s32.totalorder %s66, %s67
    %p76 = scmp.eq.s32.totalorder %s14, 0
    %p77 = por %p75, %p76
    %p78 = scmp.ne.s32.totalorder %s66, %s67
    %p79 = scmp.eq.s32.totalorder %s15, 1
    %p80 = por %p78, %p79
    %p82 = scmp.ne.s32.totalorder %s67, %s81
    %p83 = scmp.eq.s32.totalorder %s15, 0
    %p84 = por %p82, %p83
    %s85 = ssub.s32 %s9, %s16
    %p86 = scmp.eq.s32.totalorder %s85, 0
    %s88 = sadd.s32 %s87, 1
    %s89 = scalar_select %p86, %s87, %s88
    %p92 = pneg %p86
    %p93 = scmp.eq.s32.totalorder %s9, 1
    %p94 = por %p92, %p93
    %p95 = scmp.ne.s32.totalorder %s87, %s90
    %p96 = scmp.eq.s32.totalorder %s9, 0
    %p97 = por %p95, %p96
    %p98 = scmp.ne.s32.totalorder %s87, %s90
    %p99 = scmp.eq.s32.totalorder %s14, 1
    %p100 = por %p98, %p99
    %p101 = scmp.ne.s32.totalorder %s90, %s91
    %p102 = scmp.eq.s32.totalorder %s14, 0
    %p103 = por %p101, %p102
    %p104 = scmp.ne.s32.totalorder %s90, %s91
    %p105 = scmp.eq.s32.totalorder %s15, 1
    %p106 = por %p104, %p105
    %p108 = scmp.ne.s32.totalorder %s91, %s107
    %p109 = scmp.eq.s32.totalorder %s15, 0
    %p110 = por %p108, %p109
    %p111 = scmp.le.s32.totalorder 1, %s9
    %p112 = scmp.lt.s32.totalorder %s9, 3
    %p113 = pnand %p111, %p112
    %p114 = pneg %p113
    // Predicated region
    $region9: #{tpu_custom_call.1} parent=5 // pred_check
      _
    $region10: #{tpu_custom_call.1} parent=5 // pred_check_branch
      %116 = sbr.rel (%p113) target = $region12
    $region11: #{tpu_custom_call.1} parent=5 // pred_region
      %s117 = ssub.s32 %s9, 1
      // Predicated region
      $region13: #{tpu_custom_call.1} parent=11 // pred_check
        %p118 = pneg %p56
      $region14: #{tpu_custom_call.1} parent=11 // pred_check_branch
        %120 = sbr.rel (%p118) target = $region16
      $region15: #{tpu_custom_call.1} parent=11 // pred_region
        _
      $region16: #{tpu_custom_call.1} parent=11 // pred_fallthru
        _
      // Predicated region
      $region17: #{tpu_custom_call.1} parent=11 // pred_check
        %p121 = pneg %p77
      $region18: #{tpu_custom_call.1} parent=11 // pred_check_branch
        %123 = sbr.rel (%p121) target = $region20
      $region19: #{tpu_custom_call.1} parent=11 // pred_region
        _
      $region20: #{tpu_custom_call.1} parent=11 // pred_fallthru
        _
    $region12: #{tpu_custom_call.1} parent=5 // pred_fallthru
      _
    %p124 = scmp.lt.s32.totalorder %s9, 2
    // Predicated region
    $region21: #{tpu_custom_call.1} parent=5 // pred_check
      %p125 = pneg %p124
    $region22: #{tpu_custom_call.1} parent=5 // pred_check_branch
      %127 = sbr.rel (%p125) target = $region24
    $region23: #{tpu_custom_call.1} parent=5 // pred_region
      // Predicated region
      $region25: #{tpu_custom_call.1} parent=23 // pred_check
        %p128 = pneg %p29
      $region26: #{tpu_custom_call.1} parent=23 // pred_check_branch
        %130 = sbr.rel (%p128) target = $region28
      $region27: #{tpu_custom_call.1} parent=23 // pred_region
        %p131 = scmp.lt.s32.totalorder %s9, 1
        %s132 = scalar_select %p131, %s9, 1
        %s133 = smul.addr %s132, 12
        %s134 = smul.addr %s133, 8
        %s135 = scalar_lea.vmem %s0, %s134
      $region28: #{tpu_custom_call.1} parent=23 // pred_fallthru
        _
    $region24: #{tpu_custom_call.1} parent=5 // pred_fallthru
      _
    %p136 = scmp.le.s32.totalorder 1, %s9
    %p137 = scmp.lt.s32.totalorder %s9, 3
    %p138 = pnand %p136, %p137
    %p139 = pneg %p138
    // Predicated region
    $region29: #{tpu_custom_call.1} parent=5 // pred_check
      _
    $region30: #{tpu_custom_call.1} parent=5 // pred_check_branch
      %141 = sbr.rel (%p138) target = $region32
    $region31: #{tpu_custom_call.1} parent=5 // pred_region
      %s142 = ssub.s32 %s9, 1
      %p143 = scmp.lt.s32.totalorder %s14, 1
      %s144 = scalar_select %p143, %s14, 1
      %s145 = smul.addr %s144, 12
      %s146 = smul.addr %s145, 8
      %s147 = scalar_lea.vmem %s0, %s146
      %p148 = pneg %p35
      %p149 = pneg %p32
      %p150 = pneg %p56
      %p151 = pneg %p53
      %p152 = pneg %p77
      %p153 = pneg %p74
      %p154 = pneg %p103
      %p155 = pneg %p100
      %p156 = scmp.lt.s32.totalorder %s14, 1
      %s157 = scalar_select %p156, %s14, 1
      %s158 = smul.addr %s157, 10
      %s159 = smul.addr %s158, 8
      %s160 = scalar_lea.vmem %s3, %s159
      %p161 = scmp.lt.s32.totalorder %s14, 1
      %s162 = scalar_select %p161, %s14, 1
      %s163 = smul.addr %s162, 12
      %s164 = smul.addr %s163, 8
      %s165 = scalar_lea.vmem %s0, %s164
      %p166 = scmp.lt.s32.totalorder %s14, 1
      %s167 = scalar_select %p166, %s14, 1
      %s168 = smul.addr %s167, 10
      %s169 = smul.addr %s168, 8
      %s170 = scalar_lea.vmem %s3, %s169
      %v171 = vld [vmem:[%s1] sm:$0x7f]
      %v172 = vld [vmem:[%s2] sm:$0x7f]
      loop: start=0, step=1, limit=10
      $region33: #{tpu_custom_call.1} parent=31 // loop_pre_header
        _
      $region34: #{tpu_custom_call.1} parent=31 // loop_header
        %s174 = sphi 0, %s178
        %p175 = scmp.ge.s32.totalorder %s174, 10
      $region35: #{tpu_custom_call.1} parent=31 // loop_header_branch
        %177 = sbr.rel (%p175) target = $region39
      $region36: #{tpu_custom_call.1} parent=31 // loop_body
        %s179 = smul.u32 %s174, 8
        %s180 = scalar_lea.vmem %s165, %s179
        %v181 = vld [vmem:[%s180] sm:$0x1f]
        %vm182 = vcmask 102400
        %183 = vst.msk [vmem:[#allocation2] sm:$0x1f] %vm182, %v181
        %185 = vrot.lane.b32.xlu0 %v181, 127
        %v186 = vpop.permute.xlu0 %185
        %188 = vst.msk [vmem:[#allocation2 + $0x5] sm:$0x1f] %vm182, %v186
        %189 = vrot.lane.b32.xlu0 %v181, 126
        %v190 = vpop.permute.xlu0 %189
        %192 = vst.msk [vmem:[#allocation2 + $0xa] sm:$0x1f] %vm182, %v190
        %s193 = sadd.s32 %s174, 1
        %s194 = smul.u32 %s193, 8
        %s195 = scalar_lea.vmem %s165, %s194
        %v196 = vld [vmem:[%s195] sm:$0x1f]
        %197 = vst.msk [vmem:[#allocation2 + $0xf] sm:$0x1f] %vm182, %v196
        %199 = vrot.lane.b32.xlu0 %v196, 127
        %v200 = vpop.permute.xlu0 %199
        %202 = vst.msk [vmem:[#allocation2 + $0x14] sm:$0x1f] %vm182, %v200
        %203 = vrot.lane.b32.xlu0 %v196, 126
        %v204 = vpop.permute.xlu0 %203
        %206 = vst.msk [vmem:[#allocation2 + $0x19] sm:$0x1f] %vm182, %v204
        %s207 = sadd.s32 %s174, 2
        %s208 = smul.u32 %s207, 8
        %s209 = scalar_lea.vmem %s165, %s208
        %v210 = vld [vmem:[%s209] sm:$0x1f]
        %211 = vst.msk [vmem:[#allocation2 + $0x1e] sm:$0x1f] %vm182, %v210
        %213 = vrot.lane.b32.xlu0 %v210, 127
        %v214 = vpop.permute.xlu0 %213
        %216 = vst.msk [vmem:[#allocation2 + $0x23] sm:$0x1f] %vm182, %v214
        %217 = vrot.lane.b32.xlu0 %v210, 126
        %v218 = vpop.permute.xlu0 %217
        %220 = vst.msk [vmem:[#allocation2 + $0x28] sm:$0x1f] %vm182, %v218
        %v221 = vld [vmem:[#allocation2] sm:$0xff]
        %v222 = vld [vmem:[#allocation2 + $0x8] sm:$0xff]
        %v223 = vld [vmem:[#allocation2 + $0x10] sm:$0xff]
        %v224 = vld [vmem:[#allocation2 + $0x18] sm:$0xff]
        %v225 = vld [vmem:[#allocation2 + $0x20] sm:$0xff]
        %v226 = vld [vmem:[#allocation2 + $0x28] sm:$0x1f]
        %228 = vset.pattern.permute.xlu0 0
        %229 = vperm.xlu0 %228, %v172
        %v230 = vpop.permute.xlu0 %229
        %vm232 = vcmask 367616
        %v234 = vsel %vm232, %v171, 0
        %vm236 = vcmask 1044480
        %v238 = vsel %vm236, %v226, 0
        %240 = vmatprep.subr.mxu0 0.0
        %241 = vmatpush1.msra.mxu0 %v221
        %242 = vmatprep.subr.mxu0 0.0
        %243 = vmatpush1.msra.mxu0 %v222
        %244 = vmatprep.subr.mxu0 0.0
        %245 = vmatpush1.msra.mxu0 %v223
        %246 = vmatprep.subr.mxu0 0.0
        %247 = vmatpush1.msra.mxu0 %v224
        %248 = vmatprep.subr.mxu0 0.0
        %249 = vmatpush1.msra.mxu0 %v225
        %250 = vmatprep.subr.mxu0 0.0
        %251 = vmatpush1.msra.mxu0 %v238
        %252 = vmatprep.subr.mxu0 0.0
        %253 = vmatpush1.msra.mxu0 0.0
        %254 = vmatprep.subr.mxu0 0.0
        %255 = vmatpush1.msra.mxu0 0.0
        %256 = vmatprep.subr.mxu0 0.0
        %257 = vmatpush1.msra.mxu0 0.0
        %258 = vmatprep.subr.mxu0 0.0
        %259 = vmatpush1.msra.mxu0 0.0
        %260 = vmatprep.subr.mxu0 0.0
        %261 = vmatpush1.msra.mxu0 0.0
        %262 = vmatprep.subr.mxu0 0.0
        %263 = vmatpush1.msra.mxu0 0.0
        %264 = vmatprep.subr.mxu0 0.0
        %265 = vmatpush1.msra.mxu0 0.0
        %266 = vmatprep.subr.mxu0 0.0
        %267 = vmatpush1.msra.mxu0 0.0
        %268 = vmatprep.subr.mxu0 0.0
        %269 = vmatpush1.msra.mxu0 0.0
        %270 = vmatprep.subr.mxu0 0.0
        %271 = vmatpush1.msra.mxu0 0.0
        %272 = vmatprep.subr.mxu0 0.0
        %273 = vmatpush1.msra.mxu0 0.0
        %274 = vmatprep.subr.mxu0 0.0
        %275 = vmatpush1.msra.mxu0 0.0
        %276 = vmatprep.subr.mxu0 0.0
        %277 = vmatpush1.msra.mxu0 0.0
        %278 = vmatprep.subr.mxu0 0.0
        %279 = vmatpush1.msra.mxu0 0.0
        %280 = vmatprep.subr.mxu0 0.0
        %281 = vmatpush1.msra.mxu0 0.0
        %282 = vmatprep.subr.mxu0 0.0
        %283 = vmatpush1.msra.mxu0 0.0
        %284 = vmatprep.subr.mxu0 0.0
        %285 = vmatpush1.msra.mxu0 0.0
        %286 = vmatprep.subr.mxu0 0.0
        %287 = vmatpush1.msra.mxu0 0.0
        %288 = vmatprep.subr.mxu0 0.0
        %289 = vmatpush1.msra.mxu0 0.0
        %290 = vmatprep.subr.mxu0 0.0
        %291 = vmatpush1.msra.mxu0 0.0
        %292 = vmatprep.subr.mxu0 0.0
        %293 = vmatpush1.msra.mxu0 0.0
        %294 = vmatprep.subr.mxu0 0.0
        %295 = vmatpush1.msra.mxu0 0.0
        %296 = vmatprep.subr.mxu0 0.0
        %297 = vmatpush1.msra.mxu0 0.0
        %298 = vmatprep.subr.mxu0 0.0
        %299 = vmatpush1.msra.mxu0 0.0
        %300 = vmatprep.subr.mxu0 0.0
        %301 = vmatpush1.msra.mxu0 0.0
        %302 = vmatprep.subr.mxu0 0.0
        %303 = vmatpush1.msra.mxu0 0.0
        %304 = vmatprep.mubr.f32.mxu0 0.0
        %305 = vmatmul.mubr.f32.gmra.mrb[0].mxu0 %v234
        %v306 = vpop.f32.mrb[0].mxu0
        %v307 = vadd.f32 %v230, %v306
        %v308 = vpop.f32.mrb[0].mxu0
        %309 = vdwg.mxu0
        %s310 = scalar_lea.vmem %s170, %s179
        %vm311 = vcmask 104448
        %312 = vst.msk [vmem:[%s310] sm:$0x7f] %vm311, %v307
      $region37: #{tpu_custom_call.1} parent=31 // loop_footer
        %s178 = sadd.s32 1, %s174
      $region38: #{tpu_custom_call.1} parent=31 // loop_footer_branch
        %173 = sbr.rel target = $region34
      $region39: #{tpu_custom_call.1} parent=31 // loop_exit
        _
      %p313 = scmp.lt.s32.totalorder %s14, 1
      %s314 = scalar_select %p313, %s14, 1
      %s315 = smul.addr %s314, 10
      %s316 = smul.addr %s315, 8
      %s317 = scalar_lea.vmem %s3, %s316
      // Predicated region
      $region40: #{tpu_custom_call.1} parent=31 // pred_check
        %p318 = pneg %p100
      $region41: #{tpu_custom_call.1} parent=31 // pred_check_branch
        %320 = sbr.rel (%p318) target = $region43
      $region42: #{tpu_custom_call.1} parent=31 // pred_region
        _
      $region43: #{tpu_custom_call.1} parent=31 // pred_fallthru
        _
    $region32: #{tpu_custom_call.1} parent=5 // pred_fallthru
      _
    %p321 = scmp.le.s32.totalorder 2, %s9
    // Predicated region
    $region44: #{tpu_custom_call.1} parent=5 // pred_check
      %p322 = pneg %p321
    $region45: #{tpu_custom_call.1} parent=5 // pred_check_branch
      %324 = sbr.rel (%p322) target = $region47
    $region46: #{tpu_custom_call.1} parent=5 // pred_region
      %s325 = ssub.s32 %s9, 2
      // Predicated region
      $region48: #{tpu_custom_call.1} parent=46 // pred_check
        %p326 = pneg %p106
      $region49: #{tpu_custom_call.1} parent=46 // pred_check_branch
        %328 = sbr.rel (%p326) target = $region51
      $region50: #{tpu_custom_call.1} parent=46 // pred_region
        %p329 = scmp.lt.s32.totalorder %s15, 1
        %s330 = scalar_select %p329, %s15, 1
        %s331 = smul.addr %s330, 10
        %s332 = smul.addr %s331, 8
        %s333 = scalar_lea.vmem %s3, %s332
      $region51: #{tpu_custom_call.1} parent=46 // pred_fallthru
        _
    $region47: #{tpu_custom_call.1} parent=5 // pred_fallthru
      _
  $region6: #{tpu_custom_call.1} parent=0 // loop_footer
    %s13 = sadd.s32 1, %s9
  $region7: #{tpu_custom_call.1} parent=0 // loop_footer_branch
    %8 = sbr.rel target = $region3
  $region8: #{tpu_custom_call.1} parent=0 // loop_exit
    _

</llo_original>
